<compile_context>
chip_gen: v5e
topology: v5e:2x2
jax: 0.10.0
libtpu: 0.0.40
codegen_flags: <defaults>
</compile_context>

<pallas_src>
import functools

import jax
import jax.numpy as jnp
from jax.experimental import pallas as pl
from jax.experimental.pallas import tpu as pltpu


# ------------------------------ Pallas kernel ------------------------------

def _fused_encoder_kernel(x_ref, wc_ref, bc_ref, wfc_ref, bfc_ref, o_ref,
                          pooled_acc,
                          *, tile_h, width, c_in, k_pad, inv_hw):
    """One (batch b, row-tile t) step of conv3x3 + ReLU + avg-pool + FC."""
    t = pl.program_id(1)
    nt = pl.num_programs(1)

    @pl.when(t == 0)
    def _init():
        pooled_acc[...] = jnp.zeros_like(pooled_acc)

    # The whole zero-padded image of this batch element is VMEM-resident
    # (block index constant across the row-tile axis -> DMA'd once per image).
    # Slice this tile's halo'd row slab (tile_h + 2, W + 2, Cin) in-kernel and
    # widen to f32 for the shuffle-heavy im2col construction.
    row0 = pl.multiple_of(t * tile_h, tile_h)
    xs = x_ref[0, pl.ds(row0, tile_h + 2), :, :].astype(jnp.float32)

    # In-kernel im2col: 9 shifted views, zero-padded out to K_PAD lanes so the
    # matmul is a clean lane-dense (rows, 128) @ (128, 128).
    cols = []
    for di in range(3):
        for dj in range(3):
            cols.append(xs[di:di + tile_h, dj:dj + width, :])
    k_real = 9 * c_in
    if k_pad > k_real:
        cols.append(jnp.zeros((tile_h, width, k_pad - k_real), jnp.float32))
    patches = jnp.concatenate(cols, axis=-1).reshape(tile_h * width, k_pad)

    # Conv as matmul on the MXU (bf16 operands, f32 accumulation).
    acc = jnp.dot(patches.astype(wc_ref.dtype), wc_ref[...],
                  preferred_element_type=jnp.float32)
    acc = jnp.maximum(acc + bc_ref[...], 0.0)            # bias + ReLU epilogue

    # Partial global-average-pool: accumulate the sum, scale at finalize.
    pooled_acc[...] += jnp.sum(acc, axis=0, keepdims=True)

    @pl.when(t == nt - 1)
    def _finalize():
        pooled = (pooled_acc[...] * inv_hw).astype(wfc_ref.dtype)   # (1, CMID_PAD)
        logits = jnp.dot(pooled, wfc_ref[...],
                         preferred_element_type=jnp.float32)
        o_ref[0] = (logits + bfc_ref[...]).astype(o_ref.dtype)


# ------------------------------ host wrappers ------------------------------

def _pick_tile_h(h, w, max_rows=1024):
    """Largest divisor of H whose row tile (tile_h * W output rows) <= max_rows."""
    best = 1
    for th in range(1, h + 1):
        if h % th == 0 and th * w <= max_rows:
            best = th
    return best


def init_encoder_params(key, c_in=4, c_mid=32, num_classes=10,
                        k_pad=128, cmid_pad=128, nc_pad=128):
    k1, k2, k3, k4 = jax.random.split(key, 4)
    # PyTorch conv layout (Cout, Cin, kh, kw).
    w_conv = jax.random.normal(k1, (c_mid, c_in, 3, 3), jnp.float32) * 0.05
    b_conv = jax.random.normal(k2, (1, c_mid), jnp.float32) * 0.05
    w_fc = jax.random.normal(k3, (c_mid, num_classes), jnp.float32) * 0.05
    b_fc = jax.random.normal(k4, (1, num_classes), jnp.float32) * 0.05
    raw = dict(w_conv=w_conv, b_conv=b_conv, w_fc=w_fc, b_fc=b_fc)

    # Flatten conv weight to im2col ordering (kh, kw, Cin) x Cout, then zero-pad
    # every matmul dim (K, Cmid, NumClasses) up to a lane-dense 128.
    w_conv_flat = jnp.transpose(w_conv, (2, 3, 1, 0)).reshape(9 * c_in, c_mid)
    wc = jnp.zeros((k_pad, cmid_pad), jnp.bfloat16)
    wc = wc.at[:9 * c_in, :c_mid].set(w_conv_flat.astype(jnp.bfloat16))
    bc = jnp.zeros((1, cmid_pad), jnp.float32).at[:, :c_mid].set(b_conv)
    wf = jnp.zeros((cmid_pad, nc_pad), jnp.bfloat16)
    wf = wf.at[:c_mid, :num_classes].set(w_fc.astype(jnp.bfloat16))
    bf = jnp.zeros((1, nc_pad), jnp.float32).at[:, :num_classes].set(b_fc)
    padded = dict(w_conv=wc, b_conv=bc, w_fc=wf, b_fc=bf)
    return raw, padded


@functools.partial(jax.jit, static_argnames=("num_classes", "tile_h", "training"))
def dda_model_forward(params, x_nchw, *, num_classes, tile_h=None, training=True):
    """DDAModel.forward: train and eval paths both run encoder(x1)."""
    del training  # identical in both modes
    B, C, H, W = x_nchw.shape
    k_pad, cmid_pad = params["w_conv"].shape
    nc_pad = params["w_fc"].shape[1]
    assert 9 * C <= k_pad

    if tile_h is None:
        tile_h = _pick_tile_h(H, W)
    assert H % tile_h == 0
    nt = H // tile_h

    # NCHW -> NHWC, spatial zero-pad, bf16 for HBM/DMA.  No halo/slab
    # duplication in HBM: overlapping row windows are sliced in-kernel from
    # the VMEM-resident padded image.
    x = jnp.transpose(x_nchw, (0, 2, 3, 1))
    xp = jnp.pad(x, ((0, 0), (1, 1), (1, 1), (0, 0))).astype(jnp.bfloat16)

    kernel = functools.partial(
        _fused_encoder_kernel,
        tile_h=tile_h, width=W, c_in=C, k_pad=k_pad,
        inv_hw=1.0 / float(H * W))

    logits_padded = pl.pallas_call(
        kernel,
        out_shape=jax.ShapeDtypeStruct((B, 1, nc_pad), jnp.float32),
        grid_spec=pltpu.PrefetchScalarGridSpec(
            num_scalar_prefetch=0,
            grid=(B, nt),
            in_specs=[
                # Full padded image per batch element; same block for every
                # row tile -> DMA'd once per image, revisited across t.
                pl.BlockSpec((1, H + 2, W + 2, C), lambda b, t: (b, 0, 0, 0)),
                pl.BlockSpec((k_pad, cmid_pad), lambda b, t: (0, 0)),
                pl.BlockSpec((1, cmid_pad), lambda b, t: (0, 0)),
                pl.BlockSpec((cmid_pad, nc_pad), lambda b, t: (0, 0)),
                pl.BlockSpec((1, nc_pad), lambda b, t: (0, 0)),
            ],
            out_specs=pl.BlockSpec((1, 1, nc_pad), lambda b, t: (b, 0, 0)),
            scratch_shapes=[pltpu.VMEM((1, cmid_pad), jnp.float32)],
        ),
        compiler_params=pltpu.CompilerParams(
            dimension_semantics=("parallel", "arbitrary"),
            vmem_limit_bytes=32 * 1024 * 1024),
    )(xp, params["w_conv"], params["b_conv"], params["w_fc"], params["b_fc"])

    return logits_padded[:, 0, :num_classes]


def reference_forward(raw, x_nchw):
    """Pure-JAX f32 reference of the stand-in encoder."""
    B, C, H, W = x_nchw.shape
    x = jnp.transpose(x_nchw, (0, 2, 3, 1))
    xp = jnp.pad(x, ((0, 0), (1, 1), (1, 1), (0, 0)))
    cols = [xp[:, di:di + H, dj:dj + W, :]
            for di in range(3) for dj in range(3)]
    patches = jnp.concatenate(cols, axis=-1).reshape(B, H * W, 9 * C)
    w_flat = jnp.transpose(raw["w_conv"], (2, 3, 1, 0)).reshape(9 * C, -1)
    feat = jnp.maximum(patches @ w_flat + raw["b_conv"], 0.0)
    pooled = feat.mean(axis=1)
    return pooled @ raw["w_fc"] + raw["b_fc"]


# TODO(synk): base_encoder is abstract in the original module (typically a
# ResNet supplied by the caller); a small conv encoder stands in for it here.


if __name__ == "__main__":
    key = jax.random.PRNGKey(0)
    k_x, k_p = jax.random.split(key)

    B, C, H, W = 2, 4, 16, 16
    num_classes = 10

    x = jax.random.normal(k_x, (B, C, H, W), jnp.float32)   # NCHW like PyTorch
    raw_params, params = init_encoder_params(
        k_p, c_in=C, c_mid=32, num_classes=num_classes)

    # tile_h=8 -> grid (B=2, nt=2): exercises the multi-tile pooled accumulation
    # and the in-kernel dynamic row-slab slicing.
    logits = dda_model_forward(params, x, num_classes=num_classes, tile_h=8,
                               training=True)
    logits = jax.block_until_ready(logits)

    assert logits.shape == (B, num_classes)
    assert logits.dtype == jnp.float32

    ref = reference_forward(raw_params, x)
    max_err = float(jnp.max(jnp.abs(logits - ref)))
    assert max_err < 5e-2, f"max abs error {max_err}"
    print("KERNEL_OK")
</pallas_src>

<mosaic_0001>
module attributes {stable_mosaic.version = 11 : i64} {
  func.func @_fused_encoder_kernel(%arg0: i32, %arg1: i32, %arg2: memref<1x18x18x4xbf16, #tpu.memory_space<vmem>>, %arg3: memref<128x128xbf16, #tpu.memory_space<vmem>>, %arg4: memref<1x128xf32, #tpu.memory_space<vmem>>, %arg5: memref<128x128xbf16, #tpu.memory_space<vmem>>, %arg6: memref<1x128xf32, #tpu.memory_space<vmem>>, %arg7: memref<1x1x128xf32, #tpu.memory_space<vmem>>, %arg8: memref<1x128xf32, #tpu.memory_space<vmem>>) attributes {dimension_semantics = [#tpu.dimension_semantics<parallel>, #tpu.dimension_semantics<arbitrary>], iteration_bounds = array<i64: 2, 2>, scalar_prefetch = 0 : i64, scratch_operands = 1 : i64, tpu.core_type = #tpu.core_type<tc>, window_params = [{transform_indices = @transform_0, window_bounds = array<i64: 1, 18, 18, 4>}, {pipeline_mode = #tpu.pipeline_mode<synchronous>, transform_indices = @transform_1, window_bounds = array<i64: 128, 128>}, {pipeline_mode = #tpu.pipeline_mode<synchronous>, transform_indices = @transform_2, window_bounds = array<i64: 1, 128>}, {pipeline_mode = #tpu.pipeline_mode<synchronous>, transform_indices = @transform_3, window_bounds = array<i64: 128, 128>}, {pipeline_mode = #tpu.pipeline_mode<synchronous>, transform_indices = @transform_4, window_bounds = array<i64: 1, 128>}, {transform_indices = @transform_5, window_bounds = array<i64: 1, 1, 128>}]} {
    %c0_i32 = arith.constant 0 : i32
    %0 = arith.cmpi eq, %arg1, %c0_i32 : i32
    %1 = arith.extui %0 : i1 to i32
    %c0_i32_0 = arith.constant 0 : i32
    %2 = arith.cmpi ne, %1, %c0_i32_0 : i32
    scf.if %2 {
      %cst_15 = arith.constant 0.000000e+00 : f32
      %37 = vector.broadcast %cst_15 : f32 to vector<1x128xf32>
      %c0_16 = arith.constant 0 : index
      %c0_17 = arith.constant 0 : index
      %38 = vector.load %arg8[%c0_16, %c0_17] : memref<1x128xf32, #tpu.memory_space<vmem>>, vector<1x128xf32>
      tpu.vector_store %arg8[%c0_16, %c0_17], %37 {strides = array<i32>} : memref<1x128xf32, #tpu.memory_space<vmem>>, vector<1x128xf32>,
    } else {
    }
    %c8_i32 = arith.constant 8 : i32
    %3 = arith.muli %arg1, %c8_i32 : i32
    %4 = tpu.assume_multiple %3, 8 : i32
    %c0 = arith.constant 0 : index
    %5 = arith.index_cast %4 : i32 to index
    %c0_1 = arith.constant 0 : index
    %c0_2 = arith.constant 0 : index
    %6 = vector.load %arg2[%c0, %5, %c0_1, %c0_2] : memref<1x18x18x4xbf16, #tpu.memory_space<vmem>>, vector<1x10x18x4xbf16>
    %7 = vector.shape_cast %6 : vector<1x10x18x4xbf16> to vector<10x18x4xbf16>
    %8 = arith.extf %7 : vector<10x18x4xbf16> to vector<10x18x4xf32>
    %9 = vector.extract_strided_slice %8 {offsets = [0, 0, 0], sizes = [8, 16, 4], strides = [1, 1, 1]} : vector<10x18x4xf32> to vector<8x16x4xf32>
    %10 = vector.extract_strided_slice %8 {offsets = [0, 1, 0], sizes = [8, 16, 4], strides = [1, 1, 1]} : vector<10x18x4xf32> to vector<8x16x4xf32>
    %11 = vector.extract_strided_slice %8 {offsets = [0, 2, 0], sizes = [8, 16, 4], strides = [1, 1, 1]} : vector<10x18x4xf32> to vector<8x16x4xf32>
    %12 = vector.extract_strided_slice %8 {offsets = [1, 0, 0], sizes = [8, 16, 4], strides = [1, 1, 1]} : vector<10x18x4xf32> to vector<8x16x4xf32>
    %13 = vector.extract_strided_slice %8 {offsets = [1, 1, 0], sizes = [8, 16, 4], strides = [1, 1, 1]} : vector<10x18x4xf32> to vector<8x16x4xf32>
    %14 = vector.extract_strided_slice %8 {offsets = [1, 2, 0], sizes = [8, 16, 4], strides = [1, 1, 1]} : vector<10x18x4xf32> to vector<8x16x4xf32>
    %15 = vector.extract_strided_slice %8 {offsets = [2, 0, 0], sizes = [8, 16, 4], strides = [1, 1, 1]} : vector<10x18x4xf32> to vector<8x16x4xf32>
    %16 = vector.extract_strided_slice %8 {offsets = [2, 1, 0], sizes = [8, 16, 4], strides = [1, 1, 1]} : vector<10x18x4xf32> to vector<8x16x4xf32>
    %17 = vector.extract_strided_slice %8 {offsets = [2, 2, 0], sizes = [8, 16, 4], strides = [1, 1, 1]} : vector<10x18x4xf32> to vector<8x16x4xf32>
    %cst = arith.constant 0.000000e+00 : f32
    %18 = vector.broadcast %cst : f32 to vector<8x16x92xf32>
    %19 = tpu.concatenate %9, %10, %11, %12, %13, %14, %15, %16, %17, %18 in 2 : vector<8x16x4xf32>, vector<8x16x4xf32>, vector<8x16x4xf32>, vector<8x16x4xf32>, vector<8x16x4xf32>, vector<8x16x4xf32>, vector<8x16x4xf32>, vector<8x16x4xf32>, vector<8x16x4xf32>, vector<8x16x92xf32> -> vector<8x16x128xf32>
    %20 = vector.shape_cast %19 : vector<8x16x128xf32> to vector<128x128xf32>
    %21 = arith.truncf %20 : vector<128x128xf32> to vector<128x128xbf16>
    %c0_3 = arith.constant 0 : index
    %c0_4 = arith.constant 0 : index
    %22 = vector.load %arg3[%c0_3, %c0_4] : memref<128x128xbf16, #tpu.memory_space<vmem>>, vector<128x128xbf16>
    %cst_5 = arith.constant dense<0.000000e+00> : vector<128x128xf32>
    %23 = tpu.matmul %21, %22, %cst_5 {dimension_numbers = #tpu.dot_dimension_numbers<[1], [0], [0], [1], [0, 0, 1, 1], [], []>} : vector<128x128xbf16>, vector<128x128xbf16>, vector<128x128xf32> -> vector<128x128xf32>
    %c0_6 = arith.constant 0 : index
    %c0_7 = arith.constant 0 : index
    %24 = vector.load %arg4[%c0_6, %c0_7] : memref<1x128xf32, #tpu.memory_space<vmem>>, vector<1x128xf32>
    %25 = vector.broadcast %24 : vector<1x128xf32> to vector<128x128xf32>
    %26 = arith.addf %23, %25 : vector<128x128xf32>
    %cst_8 = arith.constant 0.000000e+00 : f32
    %27 = vector.broadcast %cst_8 : f32 to vector<128x128xf32>
    %28 = arith.maximumf %26, %27 : vector<128x128xf32>
    %c0_9 = arith.constant 0 : index
    %c0_10 = arith.constant 0 : index
    %29 = vector.load %arg8[%c0_9, %c0_10] : memref<1x128xf32, #tpu.memory_space<vmem>>, vector<1x128xf32>
    %cst_11 = arith.constant dense<0.000000e+00> : vector<128xf32>
    %30 = vector.multi_reduction <add>, %28, %cst_11 [0] : vector<128x128xf32> to vector<128xf32>
    %31 = vector.shape_cast %30 : vector<128xf32> to vector<1x128xf32>
    %32 = arith.addf %29, %31 : vector<1x128xf32>
    %c0_12 = arith.constant 0 : index
    %c0_13 = arith.constant 0 : index
    %33 = vector.load %arg8[%c0_12, %c0_13] : memref<1x128xf32, #tpu.memory_space<vmem>>, vector<1x128xf32>
    tpu.vector_store %arg8[%c0_12, %c0_13], %32 {strides = array<i32>} : memref<1x128xf32, #tpu.memory_space<vmem>>, vector<1x128xf32>,
    %c1_i32 = arith.constant 1 : i32
    %34 = arith.cmpi eq, %arg1, %c1_i32 : i32
    %35 = arith.extui %34 : i1 to i32
    %c0_i32_14 = arith.constant 0 : i32
    %36 = arith.cmpi ne, %35, %c0_i32_14 : i32
    scf.if %36 {
      %c0_15 = arith.constant 0 : index
      %c0_16 = arith.constant 0 : index
      %37 = vector.load %arg8[%c0_15, %c0_16] : memref<1x128xf32, #tpu.memory_space<vmem>>, vector<1x128xf32>
      %cst_17 = arith.constant 3.906250e-03 : f32
      %38 = vector.broadcast %cst_17 : f32 to vector<1x128xf32>
      %39 = arith.mulf %37, %38 : vector<1x128xf32>
      %40 = arith.truncf %39 : vector<1x128xf32> to vector<1x128xbf16>
      %c0_18 = arith.constant 0 : index
      %c0_19 = arith.constant 0 : index
      %41 = vector.load %arg5[%c0_18, %c0_19] : memref<128x128xbf16, #tpu.memory_space<vmem>>, vector<128x128xbf16>
      %cst_20 = arith.constant dense<0.000000e+00> : vector<1x128xf32>
      %42 = tpu.matmul %40, %41, %cst_20 {dimension_numbers = #tpu.dot_dimension_numbers<[1], [0], [0], [1], [0, 0, 1, 1], [], []>} : vector<1x128xbf16>, vector<128x128xbf16>, vector<1x128xf32> -> vector<1x128xf32>
      %c0_21 = arith.constant 0 : index
      %c0_22 = arith.constant 0 : index
      %43 = vector.load %arg6[%c0_21, %c0_22] : memref<1x128xf32, #tpu.memory_space<vmem>>, vector<1x128xf32>
      %44 = arith.addf %42, %43 : vector<1x128xf32>
      %c0_23 = arith.constant 0 : index
      %c0_24 = arith.constant 0 : index
      %c0_25 = arith.constant 0 : index
      %45 = vector.load %arg7[%c0_23, %c0_24, %c0_25] : memref<1x1x128xf32, #tpu.memory_space<vmem>>, vector<1x1x128xf32>
      %46 = vector.shape_cast %45 : vector<1x1x128xf32> to vector<1x128xf32>
      %47 = vector.shape_cast %44 : vector<1x128xf32> to vector<1x1x128xf32>
      tpu.vector_store %arg7[%c0_23, %c0_24, %c0_25], %47 {strides = array<i32>} : memref<1x1x128xf32, #tpu.memory_space<vmem>>, vector<1x1x128xf32>,
    } else {
    }
    return
  }
  func.func @transform_0(%arg0: i32, %arg1: i32) -> (i32, i32, i32, i32) {
    %c0_i32 = arith.constant 0 : i32
    %c0_i32_0 = arith.constant 0 : i32
    %c0_i32_1 = arith.constant 0 : i32
    %c0_i32_2 = arith.constant 0 : i32
    return %arg0, %c0_i32, %c0_i32_0, %c0_i32_1 : i32, i32, i32, i32
  }
  func.func @transform_1(%arg0: i32, %arg1: i32) -> (i32, i32) {
    %c0_i32 = arith.constant 0 : i32
    %c0_i32_0 = arith.constant 0 : i32
    %c0_i32_1 = arith.constant 0 : i32
    return %c0_i32, %c0_i32_0 : i32, i32
  }
  func.func @transform_2(%arg0: i32, %arg1: i32) -> (i32, i32) {
    %c0_i32 = arith.constant 0 : i32
    %c0_i32_0 = arith.constant 0 : i32
    %c0_i32_1 = arith.constant 0 : i32
    return %c0_i32, %c0_i32_0 : i32, i32
  }
  func.func @transform_3(%arg0: i32, %arg1: i32) -> (i32, i32) {
    %c0_i32 = arith.constant 0 : i32
    %c0_i32_0 = arith.constant 0 : i32
    %c0_i32_1 = arith.constant 0 : i32
    return %c0_i32, %c0_i32_0 : i32, i32
  }
  func.func @transform_4(%arg0: i32, %arg1: i32) -> (i32, i32) {
    %c0_i32 = arith.constant 0 : i32
    %c0_i32_0 = arith.constant 0 : i32
    %c0_i32_1 = arith.constant 0 : i32
    return %c0_i32, %c0_i32_0 : i32, i32
  }
  func.func @transform_5(%arg0: i32, %arg1: i32) -> (i32, i32, i32) {
    %c0_i32 = arith.constant 0 : i32
    %c0_i32_0 = arith.constant 0 : i32
    %c0_i32_1 = arith.constant 0 : i32
    return %arg0, %c0_i32, %c0_i32_0 : i32, i32, i32
  }
}

</mosaic_0001>

<llo_original>
// kernel: dda_model_forward.1
$region0: #{dda_model_forward.1}
  #allocation0 [shape = 'u32[]', space=smem, size = 0x4, offset = 0x4, fixed_abs, tag = 'smem constant byte address 0x4 - core index']
  #allocation1 [shape = 'u32[72,128]{1,0:T(1,128)}', space=vmem, size = 0x9000, scoped, tag = 'internal scratch']
  #allocation2 [shape = 'f32[1,128]{1,0:T(1,128)}', space=vmem, size = 0x200, scoped, tag = 'scratch operand']
  %s0 = inlined_call_operand.vmem [shape: bf16[2,18,18,4], index: 0, kind: input, shape index: {}]
  %s1 = inlined_call_operand.vmem [shape: bf16[128,128], index: 1, kind: input, shape index: {}]
  %s2 = inlined_call_operand.vmem [shape: f32[1,128], index: 2, kind: input, shape index: {}]
  %s3 = inlined_call_operand.vmem [shape: bf16[128,128], index: 3, kind: input, shape index: {}]
  %s4 = inlined_call_operand.vmem [shape: f32[1,128], index: 4, kind: input, shape index: {}]
  %s5 = inlined_call_operand.hbm [shape: f32[2,1,128], index: 5, kind: output, shape index: {}]
  %s6 = sld [smem:[#allocation0]]
  $region61: #{dda_model_forward.1} parent=0
    _
  %s8 = ssub.s32 1, %s6
  %s9 = scalar_select 0, %s8, %s6
  $region1: #{dda_model_forward.1} parent=0
    #allocation3 [shape = 'u8[1024]{0}', space=vmem, size = 0x400, scoped, tag = 'output window, operand 0']
    #allocation4 [shape = 's32[2]{0}', space=sflag, size = 0x8, scoped, tag = 'scoped memory for dda_model_forward.1']
    %10 = vsyncpa [#allocation4], 0
    %s11 = scalar_lea.sflag [#allocation4], 1
    %12 = vsyncpa %s11, 0
    loop: start=0, step=1, limit=6
    $region2: #{dda_model_forward.1} parent=1 // loop_pre_header
      _
    $region3: #{dda_model_forward.1} parent=1 // loop_header
      %s14 = sphi 0, %s18
      %p15 = scmp.ge.s32.totalorder %s14, 6
      %s21 = sphi 0, %s33
      %s22 = sphi 0, %s29
      %s23 = sphi 0, %s21
      %s24 = sphi 0, %s22
      %s25 = sphi 0, %s23
      %s26 = sphi 0, %s24
      %s36 = sphi 0, %s38
      %s39 = sphi 0, %s36
      %s40 = sphi 0, %s39
      %s56 = sphi 0, %s40
      %s60 = sphi 0, %s60
      %s62 = sphi 0, %s60
      %s63 = sphi 0, %s62
      %s77 = sphi 0, %s63
      %s81 = sphi 0, %s81
      %s83 = sphi 0, %s81
      %s84 = sphi 0, %s83
      %s98 = sphi 0, %s84
      %s102 = sphi 0, %s102
      %s104 = sphi 0, %s102
      %s105 = sphi 0, %s104
      %s119 = sphi 0, %s105
      %s123 = sphi 0, %s123
      %s125 = sphi 0, %s123
      %s126 = sphi 0, %s125
      %s140 = sphi 0, %s126
      %s146 = sphi 0, %s148
      %s149 = sphi 0, %s146
      %s150 = sphi 0, %s149
      %s166 = sphi 0, %s150
    $region4: #{dda_model_forward.1} parent=1 // loop_header_branch
      %17 = sbr.rel (%p15) target = $region8
    $region5: #{dda_model_forward.1} parent=1 // loop_body
      %s19 = ssub.s32 %s14, 1
      %s20 = ssub.s32 %s14, 2
      %s27 = sadd.s32 1, %s22
      %p28 = scmp.ge.s32.totalorder %s27, 2
      %s29 = scalar_select %p28, 0, %s27
      %s30 = sadd.s32 1, %s21
      %s31 = scalar_select %p28, %s30, %s21
      %p32 = scmp.ge.s32.totalorder %s31, 2
      %s33 = scalar_select %p32, 0, %s31
      %s34 = ssub.s32 %s21, %s33
      %p35 = scmp.eq.s32.totalorder %s34, 0
      %s37 = sadd.s32 %s36, 1
      %s38 = scalar_select %p35, %s36, %s37
      %p41 = pneg %p35
      %p42 = scmp.eq.s32.totalorder %s14, 3
      %p43 = por %p41, %p42
      %p44 = scmp.ne.s32.totalorder %s36, %s39
      %p45 = scmp.eq.s32.totalorder %s14, 0
      %p46 = por %p44, %p45
      %p47 = scmp.ne.s32.totalorder %s36, %s39
      %p48 = scmp.eq.s32.totalorder %s19, 3
      %p49 = por %p47, %p48
      %p50 = scmp.ne.s32.totalorder %s39, %s40
      %p51 = scmp.eq.s32.totalorder %s19, 0
      %p52 = por %p50, %p51
      %p53 = scmp.ne.s32.totalorder %s39, %s40
      %p54 = scmp.eq.s32.totalorder %s20, 3
      %p55 = por %p53, %p54
      %p57 = scmp.ne.s32.totalorder %s40, %s56
      %p58 = scmp.eq.s32.totalorder %s20, 0
      %p59 = por %p57, %p58
      %s61 = sadd.s32 %s60, 1
      %p64 = scmp.eq.s32.totalorder %s14, 3
      %p65 = scmp.ne.s32.totalorder %s60, %s62
      %p66 = scmp.eq.s32.totalorder %s14, 0
      %p67 = por %p65, %p66
      %p68 = scmp.ne.s32.totalorder %s60, %s62
      %p69 = scmp.eq.s32.totalorder %s19, 3
      %p70 = por %p68, %p69
      %p71 = scmp.ne.s32.totalorder %s62, %s63
      %p72 = scmp.eq.s32.totalorder %s19, 0
      %p73 = por %p71, %p72
      %p74 = scmp.ne.s32.totalorder %s62, %s63
      %p75 = scmp.eq.s32.totalorder %s20, 3
      %p76 = por %p74, %p75
      %p78 = scmp.ne.s32.totalorder %s63, %s77
      %p79 = scmp.eq.s32.totalorder %s20, 0
      %p80 = por %p78, %p79
      %s82 = sadd.s32 %s81, 1
      %p85 = scmp.eq.s32.totalorder %s14, 3
      %p86 = scmp.ne.s32.totalorder %s81, %s83
      %p87 = scmp.eq.s32.totalorder %s14, 0
      %p88 = por %p86, %p87
      %p89 = scmp.ne.s32.totalorder %s81, %s83
      %p90 = scmp.eq.s32.totalorder %s19, 3
      %p91 = por %p89, %p90
      %p92 = scmp.ne.s32.totalorder %s83, %s84
      %p93 = scmp.eq.s32.totalorder %s19, 0
      %p94 = por %p92, %p93
      %p95 = scmp.ne.s32.totalorder %s83, %s84
      %p96 = scmp.eq.s32.totalorder %s20, 3
      %p97 = por %p95, %p96
      %p99 = scmp.ne.s32.totalorder %s84, %s98
      %p100 = scmp.eq.s32.totalorder %s20, 0
      %p101 = por %p99, %p100
      %s103 = sadd.s32 %s102, 1
      %p106 = scmp.eq.s32.totalorder %s14, 3
      %p107 = scmp.ne.s32.totalorder %s102, %s104
      %p108 = scmp.eq.s32.totalorder %s14, 0
      %p109 = por %p107, %p108
      %p110 = scmp.ne.s32.totalorder %s102, %s104
      %p111 = scmp.eq.s32.totalorder %s19, 3
      %p112 = por %p110, %p111
      %p113 = scmp.ne.s32.totalorder %s104, %s105
      %p114 = scmp.eq.s32.totalorder %s19, 0
      %p115 = por %p113, %p114
      %p116 = scmp.ne.s32.totalorder %s104, %s105
      %p117 = scmp.eq.s32.totalorder %s20, 3
      %p118 = por %p116, %p117
      %p120 = scmp.ne.s32.totalorder %s105, %s119
      %p121 = scmp.eq.s32.totalorder %s20, 0
      %p122 = por %p120, %p121
      %s124 = sadd.s32 %s123, 1
      %p127 = scmp.eq.s32.totalorder %s14, 3
      %p128 = scmp.ne.s32.totalorder %s123, %s125
      %p129 = scmp.eq.s32.totalorder %s14, 0
      %p130 = por %p128, %p129
      %p131 = scmp.ne.s32.totalorder %s123, %s125
      %p132 = scmp.eq.s32.totalorder %s19, 3
      %p133 = por %p131, %p132
      %p134 = scmp.ne.s32.totalorder %s125, %s126
      %p135 = scmp.eq.s32.totalorder %s19, 0
      %p136 = por %p134, %p135
      %p137 = scmp.ne.s32.totalorder %s125, %s126
      %p138 = scmp.eq.s32.totalorder %s20, 3
      %p139 = por %p137, %p138
      %p141 = scmp.ne.s32.totalorder %s126, %s140
      %p142 = scmp.eq.s32.totalorder %s20, 0
      %p143 = por %p141, %p142
      %s144 = ssub.s32 %s21, %s33
      %p145 = scmp.eq.s32.totalorder %s144, 0
      %s147 = sadd.s32 %s146, 1
      %s148 = scalar_select %p145, %s146, %s147
      %p151 = pneg %p145
      %p152 = scmp.eq.s32.totalorder %s14, 3
      %p153 = por %p151, %p152
      %p154 = scmp.ne.s32.totalorder %s146, %s149
      %p155 = scmp.eq.s32.totalorder %s14, 0
      %p156 = por %p154, %p155
      %p157 = scmp.ne.s32.totalorder %s146, %s149
      %p158 = scmp.eq.s32.totalorder %s19, 3
      %p159 = por %p157, %p158
      %p160 = scmp.ne.s32.totalorder %s149, %s150
      %p161 = scmp.eq.s32.totalorder %s19, 0
      %p162 = por %p160, %p161
      %p163 = scmp.ne.s32.totalorder %s149, %s150
      %p164 = scmp.eq.s32.totalorder %s20, 3
      %p165 = por %p163, %p164
      %p167 = scmp.ne.s32.totalorder %s150, %s166
      %p168 = scmp.eq.s32.totalorder %s20, 0
      %p169 = por %p167, %p168
      %p170 = scmp.le.s32.totalorder 1, %s14
      %p171 = scmp.lt.s32.totalorder %s14, 5
      %p172 = pnand %p170, %p171
      %p173 = pneg %p172
      // Predicated region
      $region9: #{dda_model_forward.1} parent=5 // pred_check
        _
      $region10: #{dda_model_forward.1} parent=5 // pred_check_branch
        %175 = sbr.rel (%p172) target = $region12
      $region11: #{dda_model_forward.1} parent=5 // pred_region
        %s176 = ssub.s32 %s14, 1
        // Predicated region
        $region13: #{dda_model_forward.1} parent=11 // pred_check
          %p177 = pneg %p73
        $region14: #{dda_model_forward.1} parent=11 // pred_check_branch
          %179 = sbr.rel (%p177) target = $region16
        $region15: #{dda_model_forward.1} parent=11 // pred_region
          _
        $region16: #{dda_model_forward.1} parent=11 // pred_fallthru
          _
        // Predicated region
        $region17: #{dda_model_forward.1} parent=11 // pred_check
          %p180 = pneg %p94
        $region18: #{dda_model_forward.1} parent=11 // pred_check_branch
          %182 = sbr.rel (%p180) target = $region20
        $region19: #{dda_model_forward.1} parent=11 // pred_region
          _
        $region20: #{dda_model_forward.1} parent=11 // pred_fallthru
          _
        // Predicated region
        $region21: #{dda_model_forward.1} parent=11 // pred_check
          %p183 = pneg %p115
        $region22: #{dda_model_forward.1} parent=11 // pred_check_branch
          %185 = sbr.rel (%p183) target = $region24
        $region23: #{dda_model_forward.1} parent=11 // pred_region
          _
        $region24: #{dda_model_forward.1} parent=11 // pred_fallthru
          _
        // Predicated region
        $region25: #{dda_model_forward.1} parent=11 // pred_check
          %p186 = pneg %p136
        $region26: #{dda_model_forward.1} parent=11 // pred_check_branch
          %188 = sbr.rel (%p186) target = $region28
        $region27: #{dda_model_forward.1} parent=11 // pred_region
          _
        $region28: #{dda_model_forward.1} parent=11 // pred_fallthru
          _
      $region12: #{dda_model_forward.1} parent=5 // pred_fallthru
        _
      %p189 = scmp.lt.s32.totalorder %s14, 4
      // Predicated region
      $region29: #{dda_model_forward.1} parent=5 // pred_check
        %p190 = pneg %p189
      $region30: #{dda_model_forward.1} parent=5 // pred_check_branch
        %192 = sbr.rel (%p190) target = $region32
      $region31: #{dda_model_forward.1} parent=5 // pred_region
        // Predicated region
        $region33: #{dda_model_forward.1} parent=31 // pred_check
          %p193 = pneg %p46
        $region34: #{dda_model_forward.1} parent=31 // pred_check_branch
          %195 = sbr.rel (%p193) target = $region36
        $region35: #{dda_model_forward.1} parent=31 // pred_region
          %p196 = scmp.lt.s32.totalorder %s21, 1
          %s197 = scalar_select %p196, %s21, 1
          %s198 = smul.addr %s197, 54
          %s199 = smul.addr %s198, 4
          %s200 = scalar_lea.vmem %s0, %s199
        $region36: #{dda_model_forward.1} parent=31 // pred_fallthru
          _
      $region32: #{dda_model_forward.1} parent=5 // pred_fallthru
        _
      %p201 = scmp.le.s32.totalorder 1, %s14
      %p202 = scmp.lt.s32.totalorder %s14, 5
      %p203 = pnand %p201, %p202
      %p204 = pneg %p203
      // Predicated region
      $region37: #{dda_model_forward.1} parent=5 // pred_check
        _
      $region38: #{dda_model_forward.1} parent=5 // pred_check_branch
        %206 = sbr.rel (%p203) target = $region40
      $region39: #{dda_model_forward.1} parent=5 // pred_region
        %s207 = ssub.s32 %s14, 1
        %p208 = scmp.lt.s32.totalorder %s23, 1
        %s209 = scalar_select %p208, %s23, 1
        %s210 = smul.addr %s209, 54
        %s211 = smul.addr %s210, 4
        %s212 = scalar_lea.vmem %s0, %s211
        %p213 = pneg %p52
        %p214 = pneg %p49
        %p215 = pneg %p73
        %p216 = pneg %p70
        %p217 = pneg %p94
        %p218 = pneg %p91
        %p219 = pneg %p115
        %p220 = pneg %p112
        %p221 = pneg %p136
        %p222 = pneg %p133
        %p223 = pneg %p162
        %p224 = pneg %p159
        %s225 = sand.u32 %s149, 1
        %s226 = scalar_lea.sflag [#allocation4], %s225
        %s227 = sand.u32 %s149, 1
        %s228 = scalar_lea.vmem [#allocation3], %s227
        %p229 = scmp.lt.s32.totalorder %s23, 1
        %s230 = scalar_select %p229, %s23, 1
        %s231 = smul.addr %s230, 54
        %s232 = smul.addr %s231, 4
        %s233 = scalar_lea.vmem %s0, %s232
        %p234 = scmp.eq.s32.totalorder %s24, 0
        // Predicated region
        $region41: #{dda_model_forward.1} parent=39 // pred_check
          %p235 = pneg %p234
        $region42: #{dda_model_forward.1} parent=39 // pred_check_branch
          %237 = sbr.rel (%p235) target = $region44
        $region43: #{dda_model_forward.1} parent=39 // pred_region
          %238 = vst [vmem:[#allocation2] sm:$0x1] 0.0
        $region44: #{dda_model_forward.1} parent=39 // pred_fallthru
          _
        %s239 = smul.u32 %s24, 8
        %s240 = smul.u32 %s239, 3
        %s241 = smul.addr %s240, 4
        %s242 = scalar_lea.vmem %s233, %s241
        %v243 = vld [vmem:[%s242] sm:$0xf]
        %v244 = vld [vmem:[%s242 + $0x4] sm:$0xf]
        %v245 = vld [vmem:[%s242 + $0x8] sm:$0x1]
        %v246 = vld [vmem:[%s242 + $0xc] sm:$0xf]
        %v247 = vld [vmem:[%s242 + $0x10] sm:$0xf]
        %v248 = vld [vmem:[%s242 + $0x14] sm:$0x1]
        %v249 = vld [vmem:[%s242 + $0x18] sm:$0xf]
        %v250 = vld [vmem:[%s242 + $0x1c] sm:$0xf]
        %v251 = vld [vmem:[%s242 + $0x20] sm:$0x1]
        %v252 = vld [vmem:[%s242 + $0x24] sm:$0xf]
        %v253 = vld [vmem:[%s242 + $0x28] sm:$0xf]
        %v254 = vld [vmem:[%s242 + $0x2c] sm:$0x1]
        %v255 = vld [vmem:[%s242 + $0x30] sm:$0xf]
        %v256 = vld [vmem:[%s242 + $0x34] sm:$0xf]
        %v257 = vld [vmem:[%s242 + $0x38] sm:$0x1]
        %v258 = vld [vmem:[%s242 + $0x3c] sm:$0xf]
        %v259 = vld [vmem:[%s242 + $0x40] sm:$0xf]
        %v260 = vld [vmem:[%s242 + $0x44] sm:$0x1]
        %v261 = vld [vmem:[%s242 + $0x48] sm:$0xf]
        %v262 = vld [vmem:[%s242 + $0x4c] sm:$0xf]
        %v263 = vld [vmem:[%s242 + $0x50] sm:$0x1]
        %v264 = vld [vmem:[%s242 + $0x54] sm:$0xf]
        %v265 = vld [vmem:[%s242 + $0x58] sm:$0xf]
        %v266 = vld [vmem:[%s242 + $0x5c] sm:$0x1]
        %v267 = vld [vmem:[%s242 + $0x60] sm:$0xf]
        %v268 = vld [vmem:[%s242 + $0x64] sm:$0xf]
        %v269 = vld [vmem:[%s242 + $0x68] sm:$0x1]
        %v270 = vld [vmem:[%s242 + $0x6c] sm:$0xf]
        %v271 = vld [vmem:[%s242 + $0x70] sm:$0xf]
        %v272 = vld [vmem:[%s242 + $0x74] sm:$0x1]
        %v273 = vunpack.c.l.bf16 %v243
        %v274 = vunpack.c.l.bf16 %v244
        %v275 = vunpack.c.l.bf16 %v245
        %v276 = vunpack.c.l.bf16 %v246
        %v277 = vunpack.c.l.bf16 %v247
        %v278 = vunpack.c.l.bf16 %v248
        %v279 = vunpack.c.l.bf16 %v249
        %v280 = vunpack.c.l.bf16 %v250
        %v281 = vunpack.c.l.bf16 %v251
        %v282 = vunpack.c.l.bf16 %v252
        %v283 = vunpack.c.l.bf16 %v253
        %v284 = vunpack.c.l.bf16 %v254
        %v285 = vunpack.c.l.bf16 %v255
        %v286 = vunpack.c.l.bf16 %v256
        %v287 = vunpack.c.l.bf16 %v257
        %v288 = vunpack.c.l.bf16 %v258
        %v289 = vunpack.c.l.bf16 %v259
        %v290 = vunpack.c.l.bf16 %v260
        %v291 = vunpack.c.l.bf16 %v261
        %v292 = vunpack.c.l.bf16 %v262
        %v293 = vunpack.c.l.bf16 %v263
        %v294 = vunpack.c.l.bf16 %v264
        %v295 = vunpack.c.l.bf16 %v265
        %v296 = vunpack.c.l.bf16 %v266
        %v297 = vunpack.c.l.bf16 %v267
        %v298 = vunpack.c.l.bf16 %v268
        %v299 = vunpack.c.l.bf16 %v269
        %v300 = vunpack.c.l.bf16 %v270
        %v301 = vunpack.c.l.bf16 %v271
        %v302 = vunpack.c.l.bf16 %v272
        %vm327 = vcmask 1046528
        %v328 = vrot.slane %v273, 1
        %v329 = vrot.slane %v274, 1
        %v330 = vsel %vm327, %v328, %v329
        %v331 = vrot.slane %v275, 1
        %v332 = vsel %vm327, %v329, %v331
        %v333 = vrot.slane %v276, 1
        %v334 = vrot.slane %v277, 1
        %v335 = vsel %vm327, %v333, %v334
        %v336 = vrot.slane %v278, 1
        %v337 = vsel %vm327, %v334, %v336
        %v338 = vrot.slane %v279, 1
        %v339 = vrot.slane %v280, 1
        %v340 = vsel %vm327, %v338, %v339
        %v341 = vrot.slane %v281, 1
        %v342 = vsel %vm327, %v339, %v341
        %v343 = vrot.slane %v282, 1
        %v344 = vrot.slane %v283, 1
        %v345 = vsel %vm327, %v343, %v344
        %v346 = vrot.slane %v284, 1
        %v347 = vsel %vm327, %v344, %v346
        %v348 = vrot.slane %v285, 1
        %v349 = vrot.slane %v286, 1
        %v350 = vsel %vm327, %v348, %v349
        %v351 = vrot.slane %v287, 1
        %v352 = vsel %vm327, %v349, %v351
        %v353 = vrot.slane %v288, 1
        %v354 = vrot.slane %v289, 1
        %v355 = vsel %vm327, %v353, %v354
        %v356 = vrot.slane %v290, 1
        %v357 = vsel %vm327, %v354, %v356
        %v358 = vrot.slane %v291, 1
        %v359 = vrot.slane %v292, 1
        %v360 = vsel %vm327, %v358, %v359
        %v361 = vrot.slane %v293, 1
        %v362 = vsel %vm327, %v359, %v361
        %v363 = vrot.slane %v294, 1
        %v364 = vrot.slane %v295, 1
        %v365 = vsel %vm327, %v363, %v364
        %v366 = vrot.slane %v296, 1
        %v367 = vsel %vm327, %v364, %v366
        %368 = vrot.lane.b32.xlu0 %v330, 4
        %v369 = vpop.permute.xlu0 %368
        %370 = vrot.lane.b32.xlu0 %v332, 4
        %v371 = vpop.permute.xlu0 %370
        %372 = vrot.lane.b32.xlu0 %v335, 4
        %v373 = vpop.permute.xlu0 %372
        %374 = vrot.lane.b32.xlu0 %v337, 4
        %v375 = vpop.permute.xlu0 %374
        %376 = vrot.lane.b32.xlu0 %v340, 4
        %v377 = vpop.permute.xlu0 %376
        %378 = vrot.lane.b32.xlu0 %v342, 4
        %v379 = vpop.permute.xlu0 %378
        %380 = vrot.lane.b32.xlu0 %v345, 4
        %v381 = vpop.permute.xlu0 %380
        %382 = vrot.lane.b32.xlu0 %v347, 4
        %v383 = vpop.permute.xlu0 %382
        %384 = vrot.lane.b32.xlu0 %v350, 4
        %v385 = vpop.permute.xlu0 %384
        %386 = vrot.lane.b32.xlu0 %v352, 4
        %v387 = vpop.permute.xlu0 %386
        %388 = vrot.lane.b32.xlu0 %v355, 4
        %v389 = vpop.permute.xlu0 %388
        %390 = vrot.lane.b32.xlu0 %v357, 4
        %v391 = vpop.permute.xlu0 %390
        %392 = vrot.lane.b32.xlu0 %v360, 4
        %v393 = vpop.permute.xlu0 %392
        %394 = vrot.lane.b32.xlu0 %v362, 4
        %v395 = vpop.permute.xlu0 %394
        %396 = vrot.lane.b32.xlu0 %v365, 4
        %v397 = vpop.permute.xlu0 %396
        %398 = vrot.lane.b32.xlu0 %v367, 4
        %v399 = vpop.permute.xlu0 %398
        %vm416 = vcmask 1045504
        %v417 = vrot.slane %v273, 2
        %v418 = vrot.slane %v274, 2
        %v419 = vsel %vm416, %v417, %v418
        %v420 = vrot.slane %v275, 2
        %v421 = vsel %vm416, %v418, %v420
        %v422 = vrot.slane %v276, 2
        %v423 = vrot.slane %v277, 2
        %v424 = vsel %vm416, %v422, %v423
        %v425 = vrot.slane %v278, 2
        %v426 = vsel %vm416, %v423, %v425
        %v427 = vrot.slane %v279, 2
        %v428 = vrot.slane %v280, 2
        %v429 = vsel %vm416, %v427, %v428
        %v430 = vrot.slane %v281, 2
        %v431 = vsel %vm416, %v428, %v430
        %v432 = vrot.slane %v282, 2
        %v433 = vrot.slane %v283, 2
        %v434 = vsel %vm416, %v432, %v433
        %v435 = vrot.slane %v284, 2
        %v436 = vsel %vm416, %v433, %v435
        %v437 = vrot.slane %v285, 2
        %v438 = vrot.slane %v286, 2
        %v439 = vsel %vm416, %v437, %v438
        %v440 = vrot.slane %v287, 2
        %v441 = vsel %vm416, %v438, %v440
        %v442 = vrot.slane %v288, 2
        %v443 = vrot.slane %v289, 2
        %v444 = vsel %vm416, %v442, %v443
        %v445 = vrot.slane %v290, 2
        %v446 = vsel %vm416, %v443, %v445
        %v447 = vrot.slane %v291, 2
        %v448 = vrot.slane %v292, 2
        %v449 = vsel %vm416, %v447, %v448
        %v450 = vrot.slane %v293, 2
        %v451 = vsel %vm416, %v448, %v450
        %v452 = vrot.slane %v294, 2
        %v453 = vrot.slane %v295, 2
        %v454 = vsel %vm416, %v452, %v453
        %v455 = vrot.slane %v296, 2
        %v456 = vsel %vm416, %v453, %v455
        %457 = vrot.lane.b32.xlu0 %v419, 8
        %v458 = vpop.permute.xlu0 %457
        %459 = vrot.lane.b32.xlu0 %v421, 8
        %v460 = vpop.permute.xlu0 %459
        %461 = vrot.lane.b32.xlu0 %v424, 8
        %v462 = vpop.permute.xlu0 %461
        %463 = vrot.lane.b32.xlu0 %v426, 8
        %v464 = vpop.permute.xlu0 %463
        %465 = vrot.lane.b32.xlu0 %v429, 8
        %v466 = vpop.permute.xlu0 %465
        %467 = vrot.lane.b32.xlu0 %v431, 8
        %v468 = vpop.permute.xlu0 %467
        %469 = vrot.lane.b32.xlu0 %v434, 8
        %v470 = vpop.permute.xlu0 %469
        %471 = vrot.lane.b32.xlu0 %v436, 8
        %v472 = vpop.permute.xlu0 %471
        %473 = vrot.lane.b32.xlu0 %v439, 8
        %v474 = vpop.permute.xlu0 %473
        %475 = vrot.lane.b32.xlu0 %v441, 8
        %v476 = vpop.permute.xlu0 %475
        %477 = vrot.lane.b32.xlu0 %v444, 8
        %v478 = vpop.permute.xlu0 %477
        %479 = vrot.lane.b32.xlu0 %v446, 8
        %v480 = vpop.permute.xlu0 %479
        %481 = vrot.lane.b32.xlu0 %v449, 8
        %v482 = vpop.permute.xlu0 %481
        %483 = vrot.lane.b32.xlu0 %v451, 8
        %v484 = vpop.permute.xlu0 %483
        %485 = vrot.lane.b32.xlu0 %v454, 8
        %v486 = vpop.permute.xlu0 %485
        %487 = vrot.lane.b32.xlu0 %v456, 8
        %v488 = vpop.permute.xlu0 %487
        %507 = vrot.lane.b32.xlu0 %v276, 12
        %v508 = vpop.permute.xlu0 %507
        %509 = vrot.lane.b32.xlu0 %v277, 12
        %v510 = vpop.permute.xlu0 %509
        %511 = vrot.lane.b32.xlu0 %v279, 12
        %v512 = vpop.permute.xlu0 %511
        %513 = vrot.lane.b32.xlu0 %v280, 12
        %v514 = vpop.permute.xlu0 %513
        %515 = vrot.lane.b32.xlu0 %v282, 12
        %v516 = vpop.permute.xlu0 %515
        %517 = vrot.lane.b32.xlu0 %v283, 12
        %v518 = vpop.permute.xlu0 %517
        %519 = vrot.lane.b32.xlu0 %v285, 12
        %v520 = vpop.permute.xlu0 %519
        %521 = vrot.lane.b32.xlu0 %v286, 12
        %v522 = vpop.permute.xlu0 %521
        %523 = vrot.lane.b32.xlu0 %v288, 12
        %v524 = vpop.permute.xlu0 %523
        %525 = vrot.lane.b32.xlu0 %v289, 12
        %v526 = vpop.permute.xlu0 %525
        %527 = vrot.lane.b32.xlu0 %v291, 12
        %v528 = vpop.permute.xlu0 %527
        %529 = vrot.lane.b32.xlu0 %v292, 12
        %v530 = vpop.permute.xlu0 %529
        %531 = vrot.lane.b32.xlu0 %v294, 12
        %v532 = vpop.permute.xlu0 %531
        %533 = vrot.lane.b32.xlu0 %v295, 12
        %v534 = vpop.permute.xlu0 %533
        %535 = vrot.lane.b32.xlu0 %v297, 12
        %v536 = vpop.permute.xlu0 %535
        %537 = vrot.lane.b32.xlu0 %v298, 12
        %v538 = vpop.permute.xlu0 %537
        %v556 = vrot.slane %v297, 1
        %v557 = vrot.slane %v298, 1
        %v558 = vsel %vm327, %v556, %v557
        %v559 = vrot.slane %v299, 1
        %v560 = vsel %vm327, %v557, %v559
        %561 = vrot.lane.b32.xlu0 %v335, 16
        %v562 = vpop.permute.xlu0 %561
        %563 = vrot.lane.b32.xlu0 %v337, 16
        %v564 = vpop.permute.xlu0 %563
        %565 = vrot.lane.b32.xlu0 %v340, 16
        %v566 = vpop.permute.xlu0 %565
        %567 = vrot.lane.b32.xlu0 %v342, 16
        %v568 = vpop.permute.xlu0 %567
        %569 = vrot.lane.b32.xlu0 %v345, 16
        %v570 = vpop.permute.xlu0 %569
        %571 = vrot.lane.b32.xlu0 %v347, 16
        %v572 = vpop.permute.xlu0 %571
        %573 = vrot.lane.b32.xlu0 %v350, 16
        %v574 = vpop.permute.xlu0 %573
        %575 = vrot.lane.b32.xlu0 %v352, 16
        %v576 = vpop.permute.xlu0 %575
        %577 = vrot.lane.b32.xlu0 %v355, 16
        %v578 = vpop.permute.xlu0 %577
        %579 = vrot.lane.b32.xlu0 %v357, 16
        %v580 = vpop.permute.xlu0 %579
        %581 = vrot.lane.b32.xlu0 %v360, 16
        %v582 = vpop.permute.xlu0 %581
        %583 = vrot.lane.b32.xlu0 %v362, 16
        %v584 = vpop.permute.xlu0 %583
        %585 = vrot.lane.b32.xlu0 %v365, 16
        %v586 = vpop.permute.xlu0 %585
        %587 = vrot.lane.b32.xlu0 %v367, 16
        %v588 = vpop.permute.xlu0 %587
        %589 = vrot.lane.b32.xlu0 %v558, 16
        %v590 = vpop.permute.xlu0 %589
        %591 = vrot.lane.b32.xlu0 %v560, 16
        %v592 = vpop.permute.xlu0 %591
        %v609 = vrot.slane %v297, 2
        %v610 = vrot.slane %v298, 2
        %v611 = vsel %vm416, %v609, %v610
        %v612 = vrot.slane %v299, 2
        %v613 = vsel %vm416, %v610, %v612
        %614 = vrot.lane.b32.xlu0 %v424, 20
        %v615 = vpop.permute.xlu0 %614
        %616 = vrot.lane.b32.xlu0 %v426, 20
        %v617 = vpop.permute.xlu0 %616
        %618 = vrot.lane.b32.xlu0 %v429, 20
        %v619 = vpop.permute.xlu0 %618
        %620 = vrot.lane.b32.xlu0 %v431, 20
        %v621 = vpop.permute.xlu0 %620
        %622 = vrot.lane.b32.xlu0 %v434, 20
        %v623 = vpop.permute.xlu0 %622
        %624 = vrot.lane.b32.xlu0 %v436, 20
        %v625 = vpop.permute.xlu0 %624
        %626 = vrot.lane.b32.xlu0 %v439, 20
        %v627 = vpop.permute.xlu0 %626
        %628 = vrot.lane.b32.xlu0 %v441, 20
        %v629 = vpop.permute.xlu0 %628
        %630 = vrot.lane.b32.xlu0 %v444, 20
        %v631 = vpop.permute.xlu0 %630
        %632 = vrot.lane.b32.xlu0 %v446, 20
        %v633 = vpop.permute.xlu0 %632
        %634 = vrot.lane.b32.xlu0 %v449, 20
        %v635 = vpop.permute.xlu0 %634
        %636 = vrot.lane.b32.xlu0 %v451, 20
        %v637 = vpop.permute.xlu0 %636
        %638 = vrot.lane.b32.xlu0 %v454, 20
        %v639 = vpop.permute.xlu0 %638
        %640 = vrot.lane.b32.xlu0 %v456, 20
        %v641 = vpop.permute.xlu0 %640
        %642 = vrot.lane.b32.xlu0 %v611, 20
        %v643 = vpop.permute.xlu0 %642
        %644 = vrot.lane.b32.xlu0 %v613, 20
        %v645 = vpop.permute.xlu0 %644
        %664 = vrot.lane.b32.xlu0 %v279, 24
        %v665 = vpop.permute.xlu0 %664
        %666 = vrot.lane.b32.xlu0 %v280, 24
        %v667 = vpop.permute.xlu0 %666
        %668 = vrot.lane.b32.xlu0 %v282, 24
        %v669 = vpop.permute.xlu0 %668
        %670 = vrot.lane.b32.xlu0 %v283, 24
        %v671 = vpop.permute.xlu0 %670
        %672 = vrot.lane.b32.xlu0 %v285, 24
        %v673 = vpop.permute.xlu0 %672
        %674 = vrot.lane.b32.xlu0 %v286, 24
        %v675 = vpop.permute.xlu0 %674
        %676 = vrot.lane.b32.xlu0 %v288, 24
        %v677 = vpop.permute.xlu0 %676
        %678 = vrot.lane.b32.xlu0 %v289, 24
        %v679 = vpop.permute.xlu0 %678
        %680 = vrot.lane.b32.xlu0 %v291, 24
        %v681 = vpop.permute.xlu0 %680
        %682 = vrot.lane.b32.xlu0 %v292, 24
        %v683 = vpop.permute.xlu0 %682
        %684 = vrot.lane.b32.xlu0 %v294, 24
        %v685 = vpop.permute.xlu0 %684
        %686 = vrot.lane.b32.xlu0 %v295, 24
        %v687 = vpop.permute.xlu0 %686
        %688 = vrot.lane.b32.xlu0 %v297, 24
        %v689 = vpop.permute.xlu0 %688
        %690 = vrot.lane.b32.xlu0 %v298, 24
        %v691 = vpop.permute.xlu0 %690
        %692 = vrot.lane.b32.xlu0 %v300, 24
        %v693 = vpop.permute.xlu0 %692
        %694 = vrot.lane.b32.xlu0 %v301, 24
        %v695 = vpop.permute.xlu0 %694
        %v713 = vrot.slane %v300, 1
        %v714 = vrot.slane %v301, 1
        %v715 = vsel %vm327, %v713, %v714
        %v716 = vrot.slane %v302, 1
        %v717 = vsel %vm327, %v714, %v716
        %718 = vrot.lane.b32.xlu0 %v340, 28
        %v719 = vpop.permute.xlu0 %718
        %720 = vrot.lane.b32.xlu0 %v342, 28
        %v721 = vpop.permute.xlu0 %720
        %722 = vrot.lane.b32.xlu0 %v345, 28
        %v723 = vpop.permute.xlu0 %722
        %724 = vrot.lane.b32.xlu0 %v347, 28
        %v725 = vpop.permute.xlu0 %724
        %726 = vrot.lane.b32.xlu0 %v350, 28
        %v727 = vpop.permute.xlu0 %726
        %728 = vrot.lane.b32.xlu0 %v352, 28
        %v729 = vpop.permute.xlu0 %728
        %730 = vrot.lane.b32.xlu0 %v355, 28
        %v731 = vpop.permute.xlu0 %730
        %732 = vrot.lane.b32.xlu0 %v357, 28
        %v733 = vpop.permute.xlu0 %732
        %734 = vrot.lane.b32.xlu0 %v360, 28
        %v735 = vpop.permute.xlu0 %734
        %736 = vrot.lane.b32.xlu0 %v362, 28
        %v737 = vpop.permute.xlu0 %736
        %738 = vrot.lane.b32.xlu0 %v365, 28
        %v739 = vpop.permute.xlu0 %738
        %740 = vrot.lane.b32.xlu0 %v367, 28
        %v741 = vpop.permute.xlu0 %740
        %742 = vrot.lane.b32.xlu0 %v558, 28
        %v743 = vpop.permute.xlu0 %742
        %744 = vrot.lane.b32.xlu0 %v560, 28
        %v745 = vpop.permute.xlu0 %744
        %746 = vrot.lane.b32.xlu0 %v715, 28
        %v747 = vpop.permute.xlu0 %746
        %748 = vrot.lane.b32.xlu0 %v717, 28
        %v749 = vpop.permute.xlu0 %748
        %v766 = vrot.slane %v300, 2
        %v767 = vrot.slane %v301, 2
        %v768 = vsel %vm416, %v766, %v767
        %v769 = vrot.slane %v302, 2
        %v770 = vsel %vm416, %v767, %v769
        %771 = vrot.lane.b32.xlu0 %v429, 32
        %v772 = vpop.permute.xlu0 %771
        %773 = vrot.lane.b32.xlu0 %v431, 32
        %v774 = vpop.permute.xlu0 %773
        %775 = vrot.lane.b32.xlu0 %v434, 32
        %v776 = vpop.permute.xlu0 %775
        %777 = vrot.lane.b32.xlu0 %v436, 32
        %v778 = vpop.permute.xlu0 %777
        %779 = vrot.lane.b32.xlu0 %v439, 32
        %v780 = vpop.permute.xlu0 %779
        %781 = vrot.lane.b32.xlu0 %v441, 32
        %v782 = vpop.permute.xlu0 %781
        %783 = vrot.lane.b32.xlu0 %v444, 32
        %v784 = vpop.permute.xlu0 %783
        %785 = vrot.lane.b32.xlu0 %v446, 32
        %v786 = vpop.permute.xlu0 %785
        %787 = vrot.lane.b32.xlu0 %v449, 32
        %v788 = vpop.permute.xlu0 %787
        %789 = vrot.lane.b32.xlu0 %v451, 32
        %v790 = vpop.permute.xlu0 %789
        %791 = vrot.lane.b32.xlu0 %v454, 32
        %v792 = vpop.permute.xlu0 %791
        %793 = vrot.lane.b32.xlu0 %v456, 32
        %v794 = vpop.permute.xlu0 %793
        %795 = vrot.lane.b32.xlu0 %v611, 32
        %v796 = vpop.permute.xlu0 %795
        %797 = vrot.lane.b32.xlu0 %v613, 32
        %v798 = vpop.permute.xlu0 %797
        %799 = vrot.lane.b32.xlu0 %v768, 32
        %v800 = vpop.permute.xlu0 %799
        %801 = vrot.lane.b32.xlu0 %v770, 32
        %v802 = vpop.permute.xlu0 %801
        %vm819 = vcmask 31744
        %v820 = vsel %vm819, %v273, %v369
        %v821 = vsel %vm819, %v274, %v371
        %v822 = vsel %vm819, %v276, %v373
        %v823 = vsel %vm819, %v277, %v375
        %v824 = vsel %vm819, %v279, %v377
        %v825 = vsel %vm819, %v280, %v379
        %v826 = vsel %vm819, %v282, %v381
        %v827 = vsel %vm819, %v283, %v383
        %v828 = vsel %vm819, %v285, %v385
        %v829 = vsel %vm819, %v286, %v387
        %v830 = vsel %vm819, %v288, %v389
        %v831 = vsel %vm819, %v289, %v391
        %v832 = vsel %vm819, %v291, %v393
        %v833 = vsel %vm819, %v292, %v395
        %v834 = vsel %vm819, %v294, %v397
        %v835 = vsel %vm819, %v295, %v399
        %vm836 = vcmask 64512
        %v837 = vsel %vm836, %v820, %v458
        %v838 = vsel %vm836, %v821, %v460
        %v839 = vsel %vm836, %v822, %v462
        %v840 = vsel %vm836, %v823, %v464
        %v841 = vsel %vm836, %v824, %v466
        %v842 = vsel %vm836, %v825, %v468
        %v843 = vsel %vm836, %v826, %v470
        %v844 = vsel %vm836, %v827, %v472
        %v845 = vsel %vm836, %v828, %v474
        %v846 = vsel %vm836, %v829, %v476
        %v847 = vsel %vm836, %v830, %v478
        %v848 = vsel %vm836, %v831, %v480
        %v849 = vsel %vm836, %v832, %v482
        %v850 = vsel %vm836, %v833, %v484
        %v851 = vsel %vm836, %v834, %v486
        %v852 = vsel %vm836, %v835, %v488
        %vm853 = vcmask 97280
        %v854 = vsel %vm853, %v837, %v508
        %v855 = vsel %vm853, %v838, %v510
        %v856 = vsel %vm853, %v839, %v512
        %v857 = vsel %vm853, %v840, %v514
        %v858 = vsel %vm853, %v841, %v516
        %v859 = vsel %vm853, %v842, %v518
        %v860 = vsel %vm853, %v843, %v520
        %v861 = vsel %vm853, %v844, %v522
        %v862 = vsel %vm853, %v845, %v524
        %v863 = vsel %vm853, %v846, %v526
        %v864 = vsel %vm853, %v847, %v528
        %v865 = vsel %vm853, %v848, %v530
        %v866 = vsel %vm853, %v849, %v532
        %v867 = vsel %vm853, %v850, %v534
        %v868 = vsel %vm853, %v851, %v536
        %v869 = vsel %vm853, %v852, %v538
        %vm870 = vcmask 130048
        %v871 = vsel %vm870, %v854, %v562
        %v872 = vsel %vm870, %v855, %v564
        %v873 = vsel %vm870, %v856, %v566
        %v874 = vsel %vm870, %v857, %v568
        %v875 = vsel %vm870, %v858, %v570
        %v876 = vsel %vm870, %v859, %v572
        %v877 = vsel %vm870, %v860, %v574
        %v878 = vsel %vm870, %v861, %v576
        %v879 = vsel %vm870, %v862, %v578
        %v880 = vsel %vm870, %v863, %v580
        %v881 = vsel %vm870, %v864, %v582
        %v882 = vsel %vm870, %v865, %v584
        %v883 = vsel %vm870, %v866, %v586
        %v884 = vsel %vm870, %v867, %v588
        %v885 = vsel %vm870, %v868, %v590
        %v886 = vsel %vm870, %v869, %v592
        %vm887 = vcmask 162816
        %v888 = vsel %vm887, %v871, %v615
        %v889 = vsel %vm887, %v872, %v617
        %v890 = vsel %vm887, %v873, %v619
        %v891 = vsel %vm887, %v874, %v621
        %v892 = vsel %vm887, %v875, %v623
        %v893 = vsel %vm887, %v876, %v625
        %v894 = vsel %vm887, %v877, %v627
        %v895 = vsel %vm887, %v878, %v629
        %v896 = vsel %vm887, %v879, %v631
        %v897 = vsel %vm887, %v880, %v633
        %v898 = vsel %vm887, %v881, %v635
        %v899 = vsel %vm887, %v882, %v637
        %v900 = vsel %vm887, %v883, %v639
        %v901 = vsel %vm887, %v884, %v641
        %v902 = vsel %vm887, %v885, %v643
        %v903 = vsel %vm887, %v886, %v645
        %vm904 = vcmask 195584
        %v905 = vsel %vm904, %v888, %v665
        %v906 = vsel %vm904, %v889, %v667
        %v907 = vsel %vm904, %v890, %v669
        %v908 = vsel %vm904, %v891, %v671
        %v909 = vsel %vm904, %v892, %v673
        %v910 = vsel %vm904, %v893, %v675
        %v911 = vsel %vm904, %v894, %v677
        %v912 = vsel %vm904, %v895, %v679
        %v913 = vsel %vm904, %v896, %v681
        %v914 = vsel %vm904, %v897, %v683
        %v915 = vsel %vm904, %v898, %v685
        %v916 = vsel %vm904, %v899, %v687
        %v917 = vsel %vm904, %v900, %v689
        %v918 = vsel %vm904, %v901, %v691
        %v919 = vsel %vm904, %v902, %v693
        %v920 = vsel %vm904, %v903, %v695
        %vm921 = vcmask 228352
        %v922 = vsel %vm921, %v905, %v719
        %v923 = vsel %vm921, %v906, %v721
        %v924 = vsel %vm921, %v907, %v723
        %v925 = vsel %vm921, %v908, %v725
        %v926 = vsel %vm921, %v909, %v727
        %v927 = vsel %vm921, %v910, %v729
        %v928 = vsel %vm921, %v911, %v731
        %v929 = vsel %vm921, %v912, %v733
        %v930 = vsel %vm921, %v913, %v735
        %v931 = vsel %vm921, %v914, %v737
        %v932 = vsel %vm921, %v915, %v739
        %v933 = vsel %vm921, %v916, %v741
        %v934 = vsel %vm921, %v917, %v743
        %v935 = vsel %vm921, %v918, %v745
        %v936 = vsel %vm921, %v919, %v747
        %v937 = vsel %vm921, %v920, %v749
        %vm938 = vcmask 261120
        %v939 = vsel %vm938, %v922, %v772
        %v940 = vsel %vm938, %v923, %v774
        %v941 = vsel %vm938, %v924, %v776
        %v942 = vsel %vm938, %v925, %v778
        %v943 = vsel %vm938, %v926, %v780
        %v944 = vsel %vm938, %v927, %v782
        %v945 = vsel %vm938, %v928, %v784
        %v946 = vsel %vm938, %v929, %v786
        %v947 = vsel %vm938, %v930, %v788
        %v948 = vsel %vm938, %v931, %v790
        %v949 = vsel %vm938, %v932, %v792
        %v950 = vsel %vm938, %v933, %v794
        %v951 = vsel %vm938, %v934, %v796
        %v952 = vsel %vm938, %v935, %v798
        %v953 = vsel %vm938, %v936, %v800
        %v954 = vsel %vm938, %v937, %v802
        %vm955 = vcmask 293888
        %v956 = vsel %vm955, %v939, 0.0
        %v957 = vsel %vm955, %v940, 0.0
        %v958 = vsel %vm955, %v941, 0.0
        %v959 = vsel %vm955, %v942, 0.0
        %v960 = vsel %vm955, %v943, 0.0
        %v961 = vsel %vm955, %v944, 0.0
        %v962 = vsel %vm955, %v945, 0.0
        %v963 = vsel %vm955, %v946, 0.0
        %v964 = vsel %vm955, %v947, 0.0
        %v965 = vsel %vm955, %v948, 0.0
        %v966 = vsel %vm955, %v949, 0.0
        %v967 = vsel %vm955, %v950, 0.0
        %v968 = vsel %vm955, %v951, 0.0
        %v969 = vsel %vm955, %v952, 0.0
        %v970 = vsel %vm955, %v953, 0.0
        %v971 = vsel %vm955, %v954, 0.0
        %v972 = vpack.c.bf16 %v957, %v956
        %v973 = vpack.c.bf16 %v959, %v958
        %v974 = vpack.c.bf16 %v961, %v960
        %v975 = vpack.c.bf16 %v963, %v962
        %v976 = vpack.c.bf16 %v965, %v964
        %v977 = vpack.c.bf16 %v967, %v966
        %v978 = vpack.c.bf16 %v969, %v968
        %v979 = vpack.c.bf16 %v971, %v970
        %v980 = vld [vmem:[%s1] sm:$0xf]
        %v981 = vld [vmem:[%s1 + $0x4] sm:$0xf]
        %v982 = vld [vmem:[%s1 + $0x8] sm:$0xf]
        %v983 = vld [vmem:[%s1 + $0xc] sm:$0xf]
        %v984 = vld [vmem:[%s1 + $0x10] sm:$0xf]
        %v985 = vld [vmem:[%s1 + $0x14] sm:$0xf]
        %v986 = vld [vmem:[%s1 + $0x18] sm:$0xf]
        %v987 = vld [vmem:[%s1 + $0x1c] sm:$0xf]
        %v988 = vld [vmem:[%s1 + $0x20] sm:$0xf]
        %v989 = vld [vmem:[%s1 + $0x24] sm:$0xf]
        %v990 = vld [vmem:[%s1 + $0x28] sm:$0xf]
        %v991 = vld [vmem:[%s1 + $0x2c] sm:$0xf]
        %v992 = vld [vmem:[%s1 + $0x30] sm:$0xf]
        %v993 = vld [vmem:[%s1 + $0x34] sm:$0xf]
        %v994 = vld [vmem:[%s1 + $0x38] sm:$0xf]
        %v995 = vld [vmem:[%s1 + $0x3c] sm:$0xf]
        %v996 = vld [vmem:[%s2] sm:$0x1]
        %v998 = vperm.slane %v996, 0
        %v1016 = vunpack.c.l.b16 %v980
        %v1017 = vunpack.c.l.b16 %v981
        %v1018 = vunpack.c.l.b16 %v982
        %v1019 = vunpack.c.l.b16 %v983
        %v1020 = vunpack.c.l.b16 %v984
        %v1021 = vunpack.c.l.b16 %v985
        %v1022 = vunpack.c.l.b16 %v986
        %v1023 = vunpack.c.l.b16 %v987
        %v1024 = vunpack.c.l.b16 %v988
        %v1025 = vunpack.c.l.b16 %v989
        %v1026 = vunpack.c.l.b16 %v990
        %v1027 = vunpack.c.l.b16 %v991
        %v1028 = vunpack.c.l.b16 %v992
        %v1029 = vunpack.c.l.b16 %v993
        %v1030 = vunpack.c.l.b16 %v994
        %v1031 = vunpack.c.l.b16 %v995
        %v1032 = vpack.c.b16 %v1017, %v1016
        %v1033 = vpack.c.b16 %v1019, %v1018
        %v1034 = vpack.c.b16 %v1021, %v1020
        %v1035 = vpack.c.b16 %v1023, %v1022
        %v1036 = vpack.c.b16 %v1025, %v1024
        %v1037 = vpack.c.b16 %v1027, %v1026
        %v1038 = vpack.c.b16 %v1029, %v1028
        %v1039 = vpack.c.b16 %v1031, %v1030
        %1048 = vmatpush.bf16.msra.mxu0 %v1039
        %1049 = vmatpush.bf16.msra.mxu0 %v1038
        %1050 = vmatpush.bf16.msra.mxu0 %v1037
        %1051 = vmatpush.bf16.msra.mxu0 %v1036
        %1052 = vmatpush.bf16.msra.mxu0 %v1035
        %1053 = vmatpush.bf16.msra.mxu0 %v1034
        %1054 = vmatpush.bf16.msra.mxu0 %v1033
        %1055 = vmatpush.bf16.msra.mxu0 %v1032
        %1056 = vmatmul.bf16.gmra.mxu0 %v972
        %v1057 = vpop.f32.mrf.mxu0
        %v1058 = vadd.f32 %v998, %v1057
        %v1059 = vpop.f32.mrf.mxu0
        %v1060 = vadd.f32 %v998, %v1059
        %1061 = vmatmul.bf16.gmra.mxu0 %v973
        %v1062 = vpop.f32.mrf.mxu0
        %v1063 = vadd.f32 %v998, %v1062
        %v1064 = vpop.f32.mrf.mxu0
        %v1065 = vadd.f32 %v998, %v1064
        %1066 = vmatmul.bf16.gmra.mxu0 %v974
        %v1067 = vpop.f32.mrf.mxu0
        %v1068 = vadd.f32 %v998, %v1067
        %v1069 = vpop.f32.mrf.mxu0
        %v1070 = vadd.f32 %v998, %v1069
        %1071 = vmatmul.bf16.gmra.mxu0 %v975
        %v1072 = vpop.f32.mrf.mxu0
        %v1073 = vadd.f32 %v998, %v1072
        %v1074 = vpop.f32.mrf.mxu0
        %v1075 = vadd.f32 %v998, %v1074
        %1076 = vmatmul.bf16.gmra.mxu0 %v976
        %v1077 = vpop.f32.mrf.mxu0
        %v1078 = vadd.f32 %v998, %v1077
        %v1079 = vpop.f32.mrf.mxu0
        %v1080 = vadd.f32 %v998, %v1079
        %1081 = vmatmul.bf16.gmra.mxu0 %v977
        %v1082 = vpop.f32.mrf.mxu0
        %v1083 = vadd.f32 %v998, %v1082
        %v1084 = vpop.f32.mrf.mxu0
        %v1085 = vadd.f32 %v998, %v1084
        %1086 = vmatmul.bf16.gmra.mxu0 %v978
        %v1087 = vpop.f32.mrf.mxu0
        %v1088 = vadd.f32 %v998, %v1087
        %v1089 = vpop.f32.mrf.mxu0
        %v1090 = vadd.f32 %v998, %v1089
        %1091 = vmatmul.bf16.gmra.mxu0 %v979
        %v1092 = vpop.f32.mrf.mxu0
        %v1093 = vadd.f32 %v998, %v1092
        %v1094 = vpop.f32.mrf.mxu0
        %v1095 = vadd.f32 %v998, %v1094
        %1096 = vdwg.mxu0
        %v1097 = vmax.f32 %v1058, 0.0
        %v1098 = vmax.f32 %v1060, 0.0
        %v1099 = vmax.f32 %v1063, 0.0
        %v1100 = vmax.f32 %v1065, 0.0
        %v1101 = vmax.f32 %v1068, 0.0
        %v1102 = vmax.f32 %v1070, 0.0
        %v1103 = vmax.f32 %v1073, 0.0
        %v1104 = vmax.f32 %v1075, 0.0
        %v1105 = vmax.f32 %v1078, 0.0
        %v1106 = vmax.f32 %v1080, 0.0
        %v1107 = vmax.f32 %v1083, 0.0
        %v1108 = vmax.f32 %v1085, 0.0
        %v1109 = vmax.f32 %v1088, 0.0
        %v1110 = vmax.f32 %v1090, 0.0
        %v1111 = vmax.f32 %v1093, 0.0
        %v1112 = vmax.f32 %v1095, 0.0
        %v1113 = vld [vmem:[#allocation2] sm:$0x1]
        %v1114 = vadd.f32 %v1097, %v1098
        %v1115 = vadd.f32 %v1114, %v1099
        %v1116 = vadd.f32 %v1115, %v1100
        %v1117 = vadd.f32 %v1116, %v1101
        %v1118 = vadd.f32 %v1117, %v1102
        %v1119 = vadd.f32 %v1118, %v1103
        %v1120 = vadd.f32 %v1119, %v1104
        %v1121 = vadd.f32 %v1120, %v1105
        %v1122 = vadd.f32 %v1121, %v1106
        %v1123 = vadd.f32 %v1122, %v1107
        %v1124 = vadd.f32 %v1123, %v1108
        %v1125 = vadd.f32 %v1124, %v1109
        %v1126 = vadd.f32 %v1125, %v1110
        %v1127 = vadd.f32 %v1126, %v1111
        %v1128 = vadd.f32 %v1127, %v1112
        %v1129 = vrot.slane %v1128, 4
        %v1130 = vadd.f32 %v1128, %v1129
        %v1131 = vrot.slane %v1130, 2
        %v1132 = vadd.f32 %v1130, %v1131
        %v1133 = vrot.slane %v1132, 1
        %v1134 = vadd.f32 %v1132, %v1133
        %v1135 = vadd.f32 %v1113, %v1134
        %1136 = vst [vmem:[#allocation2] sm:$0x1] %v1135
        %p1137 = scmp.eq.s32.totalorder %s24, 1
        // Predicated region
        $region45: #{dda_model_forward.1} parent=39 // pred_check
          %p1138 = pneg %p1137
        $region46: #{dda_model_forward.1} parent=39 // pred_check_branch
          %1140 = sbr.rel (%p1138) target = $region48
        $region47: #{dda_model_forward.1} parent=39 // pred_region
          %v1141 = vld [vmem:[#allocation2] sm:$0x1]
          %v1142 = vmul.f32 %v1141, 0.00390625
          %v1143 = vpack.c.bf16 %v1142, %v1142
          %v1144 = vld [vmem:[%s3] sm:$0xf]
          %v1145 = vld [vmem:[%s3 + $0x4] sm:$0xf]
          %v1146 = vld [vmem:[%s3 + $0x8] sm:$0xf]
          %v1147 = vld [vmem:[%s3 + $0xc] sm:$0xf]
          %v1148 = vld [vmem:[%s3 + $0x10] sm:$0xf]
          %v1149 = vld [vmem:[%s3 + $0x14] sm:$0xf]
          %v1150 = vld [vmem:[%s3 + $0x18] sm:$0xf]
          %v1151 = vld [vmem:[%s3 + $0x1c] sm:$0xf]
          %v1152 = vld [vmem:[%s3 + $0x20] sm:$0xf]
          %v1153 = vld [vmem:[%s3 + $0x24] sm:$0xf]
          %v1154 = vld [vmem:[%s3 + $0x28] sm:$0xf]
          %v1155 = vld [vmem:[%s3 + $0x2c] sm:$0xf]
          %v1156 = vld [vmem:[%s3 + $0x30] sm:$0xf]
          %v1157 = vld [vmem:[%s3 + $0x34] sm:$0xf]
          %v1158 = vld [vmem:[%s3 + $0x38] sm:$0xf]
          %v1159 = vld [vmem:[%s3 + $0x3c] sm:$0xf]
          %v1160 = vld [vmem:[%s4] sm:$0x1]
          %v1177 = vunpack.c.l.b16 %v1144
          %v1178 = vunpack.c.l.b16 %v1145
          %v1179 = vunpack.c.l.b16 %v1146
          %v1180 = vunpack.c.l.b16 %v1147
          %v1181 = vunpack.c.l.b16 %v1148
          %v1182 = vunpack.c.l.b16 %v1149
          %v1183 = vunpack.c.l.b16 %v1150
          %v1184 = vunpack.c.l.b16 %v1151
          %v1185 = vunpack.c.l.b16 %v1152
          %v1186 = vunpack.c.l.b16 %v1153
          %v1187 = vunpack.c.l.b16 %v1154
          %v1188 = vunpack.c.l.b16 %v1155
          %v1189 = vunpack.c.l.b16 %v1156
          %v1190 = vunpack.c.l.b16 %v1157
          %v1191 = vunpack.c.l.b16 %v1158
          %v1192 = vunpack.c.l.b16 %v1159
          %v1193 = vpack.c.b16 %v1178, %v1177
          %v1194 = vpack.c.b16 %v1180, %v1179
          %v1195 = vpack.c.b16 %v1182, %v1181
          %v1196 = vpack.c.b16 %v1184, %v1183
          %v1197 = vpack.c.b16 %v1186, %v1185
          %v1198 = vpack.c.b16 %v1188, %v1187
          %v1199 = vpack.c.b16 %v1190, %v1189
          %v1200 = vpack.c.b16 %v1192, %v1191
          %1209 = vmatpush.bf16.msra.mxu0 %v1200
          %1210 = vmatpush.bf16.msra.mxu0 %v1199
          %1211 = vmatpush.bf16.msra.mxu0 %v1198
          %1212 = vmatpush.bf16.msra.mxu0 %v1197
          %1213 = vmatpush.bf16.msra.mxu0 %v1196
          %1214 = vmatpush.bf16.msra.mxu0 %v1195
          %1215 = vmatpush.bf16.msra.mxu0 %v1194
          %1216 = vmatpush.bf16.msra.mxu0 %v1193
          %1217 = vmatmul.bf16.gmra.mxu0 %v1143
          %v1218 = vpop.f32.mrf.mxu0
          %v1219 = vadd.f32 %v1160, %v1218
          %v1220 = vpop.f32.mrf.mxu0
          %1221 = vdwg.mxu0
          %1222 = vst [vmem:[%s228] sm:$0x1] %v1219
        $region48: #{dda_model_forward.1} parent=39 // pred_fallthru
          _
        %s1223 = sand.u32 %s149, 1
        %s1224 = scalar_lea.sflag [#allocation4], %s1223
        %s1225 = sand.u32 %s149, 1
        %s1226 = scalar_lea.vmem [#allocation3], %s1225
        // Predicated region
        $region49: #{dda_model_forward.1} parent=39 // pred_check
          %p1227 = pneg %p159
        $region50: #{dda_model_forward.1} parent=39 // pred_check_branch
          %1229 = sbr.rel (%p1227) target = $region52
        $region51: #{dda_model_forward.1} parent=39 // pred_region
          %1231 = vsyncadd %s1224, 0
          %s1232 = scalar_lea.hbm %s5, %s23
          %s1234 = sshll.u32 %s1226, 4
          %s1235 = int_to_ptr.vmem [resolvable:$true] %s1234
          %s1236 = sshll.u32 %s1232, 4
          %s1237 = int_to_ptr.hbm [resolvable:$true] %s1236
          %1239 = dma.vmem_to_hbm [thread:$0]  %s1235, 16, %s1237, %s1224
        $region52: #{dda_model_forward.1} parent=39 // pred_fallthru
          _
      $region40: #{dda_model_forward.1} parent=5 // pred_fallthru
        _
      %p1240 = scmp.le.s32.totalorder 2, %s14
      // Predicated region
      $region53: #{dda_model_forward.1} parent=5 // pred_check
        %p1241 = pneg %p1240
      $region54: #{dda_model_forward.1} parent=5 // pred_check_branch
        %1243 = sbr.rel (%p1241) target = $region56
      $region55: #{dda_model_forward.1} parent=5 // pred_region
        %s1244 = ssub.s32 %s14, 2
        // Predicated region
        $region57: #{dda_model_forward.1} parent=55 // pred_check
          %p1245 = pneg %p165
        $region58: #{dda_model_forward.1} parent=55 // pred_check_branch
          %1247 = sbr.rel (%p1245) target = $region60
        $region59: #{dda_model_forward.1} parent=55 // pred_region
          %s1248 = sand.u32 %s150, 1
          %s1249 = scalar_lea.sflag [#allocation4], %s1248
          %s1250 = sand.u32 %s150, 1
          %s1251 = scalar_lea.vmem [#allocation3], %s1250
          %1253 = dma.done %s1249, 16
        $region60: #{dda_model_forward.1} parent=55 // pred_fallthru
          _
      $region56: #{dda_model_forward.1} parent=5 // pred_fallthru
        _
    $region6: #{dda_model_forward.1} parent=1 // loop_footer
      %s18 = sadd.s32 1, %s14
    $region7: #{dda_model_forward.1} parent=1 // loop_footer_branch
      %13 = sbr.rel target = $region3
    $region8: #{dda_model_forward.1} parent=1 // loop_exit
      _
    %1254 = vsyncpa [#allocation4], 1
    %s1255 = scalar_lea.sflag [#allocation4], 1
    %1256 = vsyncpa %s1255, 1

</llo_original>
